<compile_context>
chip_gen: v7x
topology: tpu7x:2x2x1
jax: 0.10.0
libtpu: 0.0.40
codegen_flags: <defaults>
</compile_context>

<pallas_src>
import functools

import jax
import jax.numpy as jnp
from jax import lax
from jax.experimental import pallas as pl
from jax.experimental.pallas import tpu as pltpu


def _cdiv(a, b):
    return (a + b - 1) // b


def _round_up(x, m):
    return _cdiv(x, m) * m


_VMEM_BUDGET = 40 * 1024 * 1024   # double-buffered working-set target (v7x-safe)
_VMEM_LIMIT = 48 * 1024 * 1024    # explicit scoped-VMEM limit (> v5e's 16 MiB default)


# --------------------------------- kernels ---------------------------------

def _head_kernel_single(x_ref, w_ref, b_ref, o_ref):
    # Single K step: no accumulator scratch; fuse bias add + cast into the store.
    acc = lax.dot_general(
        x_ref[...], w_ref[...],
        dimension_numbers=(((1,), (1,)), ((), ())),   # x[m,k] . w[n,k] -> [m,n]
        preferred_element_type=jnp.float32,
    )
    o_ref[...] = (acc + b_ref[...]).astype(o_ref.dtype)


def _head_kernel_multi(x_ref, w_ref, b_ref, o_ref, acc_ref, *,
                       k_size, tk, mask_k_tail):
    k = pl.program_id(2)

    @pl.when(k == 0)
    def _init():
        acc_ref[...] = jnp.zeros_like(acc_ref)

    x = x_ref[...]
    w = w_ref[...]
    if mask_k_tail:
        # Last K block is partial: its tail columns hold garbage (possibly
        # NaN/Inf) in BOTH operands and 0*NaN = NaN, so zero both tails.
        rem = k_size - k * tk                      # valid cols in this block
        kk = lax.broadcasted_iota(jnp.int32, (1, tk), 1)
        valid = kk < rem
        x = jnp.where(valid, x, jnp.zeros_like(x))
        w = jnp.where(valid, w, jnp.zeros_like(w))

    acc_ref[...] += lax.dot_general(
        x, w,
        dimension_numbers=(((1,), (1,)), ((), ())),
        preferred_element_type=jnp.float32,
    )

    @pl.when(k == pl.num_programs(2) - 1)
    def _finalize():
        o_ref[...] = (acc_ref[...] + b_ref[...]).astype(o_ref.dtype)


# --------------------------------- wrapper ----------------------------------

def flatten_head_forward(
    x,
    weight,
    bias,
    *,
    compute_dtype=jnp.bfloat16,   # streaming dtype; accumulation is always f32
    use_pallas=None,              # None = auto (tiny problems take the XLA fast path)
    tm=None, tn=None, tk=None,    # optional tile overrides (mostly for testing)
):
    """FlattenHead forward.

    x:      [B, n_vars, d_model, patch_num]
    weight: [target_window, nf]   (nf = d_model * patch_num)
    bias:   [target_window]
    returns [B, n_vars, target_window]  (same dtype as x)
    """
    B, n_vars, d_model, patch_num = x.shape
    nf = d_model * patch_num
    target_window = weight.shape[0]
    assert weight.shape == (target_window, nf)
    assert bias.shape == (target_window,)

    M, K, N = B * n_vars, nf, target_window
    out_dtype = x.dtype

    if use_pallas is None:
        # Tiny heads: pallas_call fixed cost + MXU lane padding beat any gain.
        use_pallas = (M * N * K >= (1 << 17)) and K >= 32 and N >= 32

    if not use_pallas:
        # Fast path: plain XLA fused GEMM, full precision (exact PyTorch math).
        y = x.reshape(M, K) @ weight.T + bias
        return y.astype(out_dtype).reshape(B, n_vars, N)

    cd = jnp.dtype(compute_dtype)
    od = jnp.dtype(out_dtype)

    # ----- glue: reshape is free; dtype casts are the only extra HBM passes -----
    x2d = x.reshape(M, K).astype(compute_dtype)        # Flatten(start_dim=-2) + merge B,n_vars
    w = weight.astype(compute_dtype)                   # (N, K) — NOT transposed, NOT padded
    b2d = bias.reshape(1, N).astype(jnp.float32)

    # ----- tile selection (padding-free; edges handled by Pallas / in-kernel mask) -----
    tn_auto = tn is None

    if tm is None:
        tm = M if M <= 512 else 512                    # 512 keeps W re-streaming low for big M
    tm = max(1, min(tm, M))
    if tm < M and tm % 8 != 0:                         # non-full M block must be 8-aligned
        tm = max(8, (tm // 8) * 8)
        tm = min(tm, M)

    if tn is None:
        tn = N if N <= 512 else 512
    tn = max(1, min(tn, N))
    if tn < N:                                         # non-full N block must be lane-aligned
        tn = N if (tn // 128) * 128 == 0 else (tn // 128) * 128

    # K tiling: prefer a single full-K step if the double-buffered footprint fits.
    fixed = 2 * tm * tn * od.itemsize + tm * tn * 4 + 2 * tn * 4
    avail = max(0, _VMEM_BUDGET - fixed)
    tk_max = avail // max(1, 2 * (tm + tn) * cd.itemsize)
    if tk is None:
        tk = K if tk_max >= K else max(128, (min(tk_max, K) // 128) * 128)
    tk = max(1, min(tk, K))
    if tk < K:                                         # non-full K block must be lane-aligned
        tk = K if (tk // 128) * 128 == 0 else (tk // 128) * 128

    # Ensure >= 2 parallel blocks so both v7x TensorCores get work (split N, not M:
    # splitting M would duplicate the dominant W HBM stream).
    if tn_auto and _cdiv(M, tm) * _cdiv(N, tn) == 1 and N >= 256:
        tn = max(128, _round_up(_cdiv(N, 2), 128))

    grid = (_cdiv(M, tm), _cdiv(N, tn), _cdiv(K, tk))
    single_k = grid[2] == 1

    if single_k:
        kernel = _head_kernel_single
        scratch = []
    else:
        kernel = functools.partial(
            _head_kernel_multi, k_size=K, tk=tk, mask_k_tail=(K % tk) != 0)
        scratch = [pltpu.VMEM((tm, tn), jnp.float32)]

    cost = pl.CostEstimate(
        flops=2 * M * N * K,
        transcendentals=0,
        bytes_accessed=(M * K + N * K) * cd.itemsize + M * N * od.itemsize + N * 4,
    )

    out = pl.pallas_call(
        kernel,
        out_shape=jax.ShapeDtypeStruct((M, N), out_dtype),
        grid_spec=pltpu.PrefetchScalarGridSpec(
            num_scalar_prefetch=0,
            grid=grid,
            in_specs=[
                pl.BlockSpec((tm, tk), lambda i, j, k: (i, k)),   # x2d  (M, K)
                pl.BlockSpec((tn, tk), lambda i, j, k: (j, k)),   # W    (N, K), untransposed
                pl.BlockSpec((1, tn), lambda i, j, k: (0, j)),    # bias (1, N)
            ],
            out_specs=pl.BlockSpec((tm, tn), lambda i, j, k: (i, j)),
            scratch_shapes=scratch,
        ),
        compiler_params=pltpu.CompilerParams(
            dimension_semantics=("parallel", "parallel", "arbitrary"),
            vmem_limit_bytes=_VMEM_LIMIT,
        ),
        cost_estimate=cost,
    )(x2d, w, b2d)

    return out.reshape(B, n_vars, N)


# --------------------------------- self-test ---------------------------------

def _ref(x, weight, bias, compute_dtype):
    """Reference: flatten -> (optionally bf16-rounded operands) @ W.T + b, f32 accumulate."""
    B, nv, d, p = x.shape
    x2d = x.reshape(B, nv, d * p)
    if compute_dtype == jnp.float32:
        xr, wr = x2d, weight
    else:
        xr = x2d.astype(compute_dtype).astype(jnp.float32)
        wr = weight.astype(compute_dtype).astype(jnp.float32)
    y = jnp.einsum("bvk,nk->bvn", xr, wr, precision=lax.Precision.HIGHEST) + bias
    return y.astype(x.dtype)


if __name__ == "__main__":
    key = jax.random.PRNGKey(0)

    def make(shape_x, nf, tw, ki):
        k1, k2, k3 = jax.random.split(jax.random.fold_in(key, ki), 3)
        xx = jax.random.normal(k1, shape_x, dtype=jnp.float32)
        ww = jax.random.normal(k2, (tw, nf), dtype=jnp.float32) * 0.05
        bb = jax.random.normal(k3, (tw,), dtype=jnp.float32) * 0.01
        return xx, ww, bb

    # 1) Small aligned case, f32 compute, Pallas path (single-K, no accumulator).
    B, nv, dm, pn, tw = 2, 4, 16, 8, 128          # nf = 128, M = 8
    x, w, b = make((B, nv, dm, pn), dm * pn, tw, 0)
    y = flatten_head_forward(x, w, b, compute_dtype=jnp.float32, use_pallas=True)
    jax.block_until_ready(y)
    assert y.shape == (B, nv, tw)
    assert jnp.allclose(y, _ref(x, w, b, jnp.float32), atol=2e-3, rtol=2e-3)

    # 2) Same case, default bf16 streaming (f32 accumulation inside the kernel).
    y = flatten_head_forward(x, w, b, use_pallas=True)
    jax.block_until_ready(y)
    assert jnp.allclose(y, _ref(x, w, b, jnp.bfloat16), atol=2e-2, rtol=2e-2)

    # 3) Ragged edges: partial M and N blocks + tiled K with in-kernel tail mask.
    B, nv, dm, pn, tw = 2, 3, 32, 21, 200         # nf = 672, M = 6
    x, w, b = make((B, nv, dm, pn), dm * pn, tw, 1)
    y = flatten_head_forward(x, w, b, compute_dtype=jnp.float32, use_pallas=True,
                             tn=128, tk=256)      # forces multi-K path, K tail = 160
    jax.block_until_ready(y)
    assert y.shape == (B, nv, tw)
    assert jnp.allclose(y, _ref(x, w, b, jnp.float32), atol=2e-3, rtol=2e-3)

    # 4) PatchTST-like head, auto tiles (full-K single step, N split across 2 TCs).
    B, nv, dm, pn, tw = 4, 7, 64, 42, 336         # nf = 2688, M = 28
    x, w, b = make((B, nv, dm, pn), dm * pn, tw, 2)
    y = flatten_head_forward(x, w, b)
    jax.block_until_ready(y)
    assert y.shape == (B, nv, tw)
    assert jnp.allclose(y, _ref(x, w, b, jnp.bfloat16), atol=2e-2, rtol=2e-2)

    # 5) Tiny head: the auto heuristic takes the plain-XLA fast path.
    B, nv, dm, pn, tw = 2, 2, 4, 4, 8
    x, w, b = make((B, nv, dm, pn), dm * pn, tw, 3)
    y = flatten_head_forward(x, w, b)
    jax.block_until_ready(y)
    assert y.shape == (B, nv, tw)
    assert jnp.allclose(y, _ref(x, w, b, jnp.float32), atol=2e-3, rtol=2e-3)

    print("KERNEL_OK")
</pallas_src>

<mosaic_0001>
module attributes {stable_mosaic.version = 11 : i64} {
  func.func @_head_kernel_single(%arg0: i32, %arg1: i32, %arg2: i32, %arg3: memref<8x128xf32, #tpu.memory_space<vmem>>, %arg4: memref<128x128xf32, #tpu.memory_space<vmem>>, %arg5: memref<1x128xf32, #tpu.memory_space<vmem>>, %arg6: memref<8x128xf32, #tpu.memory_space<vmem>>) attributes {dimension_semantics = [#tpu.dimension_semantics<parallel>, #tpu.dimension_semantics<parallel>, #tpu.dimension_semantics<arbitrary>], iteration_bounds = array<i64: 1, 1, 1>, scalar_prefetch = 0 : i64, scratch_operands = 0 : i64, tpu.core_type = #tpu.core_type<tc>, window_params = [{transform_indices = @transform_0, window_bounds = array<i64: 8, 128>}, {transform_indices = @transform_1, window_bounds = array<i64: 128, 128>}, {transform_indices = @transform_2, window_bounds = array<i64: 1, 128>}, {transform_indices = @transform_3, window_bounds = array<i64: 8, 128>}]} {
    %c0 = arith.constant 0 : index
    %c0_0 = arith.constant 0 : index
    %0 = vector.load %arg3[%c0, %c0_0] : memref<8x128xf32, #tpu.memory_space<vmem>>, vector<8x128xf32>
    %c0_1 = arith.constant 0 : index
    %c0_2 = arith.constant 0 : index
    %1 = vector.load %arg4[%c0_1, %c0_2] : memref<128x128xf32, #tpu.memory_space<vmem>>, vector<128x128xf32>
    %cst = arith.constant dense<0.000000e+00> : vector<8x128xf32>
    %2 = tpu.matmul %0, %1, %cst {dimension_numbers = #tpu.dot_dimension_numbers<[1], [1], [0], [0], [0, 0, 1, 0], [], []>} : vector<8x128xf32>, vector<128x128xf32>, vector<8x128xf32> -> vector<8x128xf32>
    %c0_3 = arith.constant 0 : index
    %c0_4 = arith.constant 0 : index
    %3 = vector.load %arg5[%c0_3, %c0_4] : memref<1x128xf32, #tpu.memory_space<vmem>>, vector<1x128xf32>
    %4 = vector.broadcast %3 : vector<1x128xf32> to vector<8x128xf32>
    %5 = arith.addf %2, %4 : vector<8x128xf32>
    %c0_5 = arith.constant 0 : index
    %c0_6 = arith.constant 0 : index
    %6 = vector.load %arg6[%c0_5, %c0_6] : memref<8x128xf32, #tpu.memory_space<vmem>>, vector<8x128xf32>
    tpu.vector_store %arg6[%c0_5, %c0_6], %5 {strides = array<i32>} : memref<8x128xf32, #tpu.memory_space<vmem>>, vector<8x128xf32>,
    return
  }
  func.func @transform_0(%arg0: i32, %arg1: i32, %arg2: i32) -> (i32, i32) {
    %c0_i32 = arith.constant 0 : i32
    return %arg0, %arg2 : i32, i32
  }
  func.func @transform_1(%arg0: i32, %arg1: i32, %arg2: i32) -> (i32, i32) {
    %c0_i32 = arith.constant 0 : i32
    return %arg1, %arg2 : i32, i32
  }
  func.func @transform_2(%arg0: i32, %arg1: i32, %arg2: i32) -> (i32, i32) {
    %c0_i32 = arith.constant 0 : i32
    %c0_i32_0 = arith.constant 0 : i32
    return %c0_i32, %arg1 : i32, i32
  }
  func.func @transform_3(%arg0: i32, %arg1: i32, %arg2: i32) -> (i32, i32) {
    %c0_i32 = arith.constant 0 : i32
    return %arg0, %arg1 : i32, i32
  }
}

</mosaic_0001>

<llo_original>
// kernel: tpu_custom_call.1
$region0: #{tpu_custom_call.1}
  #allocation0 [shape = 'u32[]', space=smem, size = 0x4, offset = 0x4, fixed_abs, tag = 'smem constant byte address 0x4 - core index']
  #allocation1 [shape = 'u32[144,128]{1,0:T(1,128)}', space=vmem, size = 0x12000, scoped, tag = 'internal scratch']
  %s0 = inlined_call_operand.hbm [shape: f32[8,128], index: 0, kind: input, shape index: {}]
  %s1 = inlined_call_operand.hbm [shape: f32[128,128], index: 1, kind: input, shape index: {}]
  %s2 = inlined_call_operand.vmem [shape: f32[1,128], index: 2, kind: input, shape index: {}]
  %s3 = inlined_call_operand.hbm [shape: f32[8,128], index: 3, kind: output, shape index: {}]
  %s4 = sld [smem:[#allocation0]]
  $region30: #{tpu_custom_call.1} parent=0
    _
  %s6 = ssub.s32 1, %s4
  %s7 = scalar_select 0, %s6, %s4
  $region1: #{tpu_custom_call.1} parent=0
    #allocation2 [shape = 'u8[4096]{0}', space=vmem, size = 0x1000, scoped, tag = 'input window, operand 0, single buffered']
    #allocation3 [shape = 's32[1]{0}', space=sflag, size = 0x4, scoped, tag = 'scoped memory for tpu_custom_call.1']
    #allocation4 [shape = 's32[1]{0}', space=sflag, size = 0x4, scoped, tag = 'scoped memory for tpu_custom_call.1']
    #allocation5 [shape = 'u8[65536]{0}', space=vmem, size = 0x10000, scoped, tag = 'input window, operand 1, single buffered']
    #allocation6 [shape = 's32[1]{0}', space=sflag, size = 0x4, scoped, tag = 'scoped memory for tpu_custom_call.1']
    #allocation7 [shape = 'u8[4096]{0}', space=vmem, size = 0x1000, scoped, tag = 'output window, operand 0, single buffered']
    %8 = vsyncpa [#allocation3], 0
    %9 = vsyncpa [#allocation6], 0
    %10 = vsyncpa [#allocation4], 0
    // Predicated region
    $region2: #{tpu_custom_call.1} parent=1 // pred_check
      _
    $region3: #{tpu_custom_call.1} parent=1 // pred_check_branch
      %12 = sbr.rel (0) target = $region5
    $region4: #{tpu_custom_call.1} parent=1 // pred_region
      %s14 = ssub.s32 128, 128
      %15 = vsyncadd [#allocation3], %s14
      %s17 = sshll.u32 [#allocation2], 4
      %s18 = int_to_ptr.vmem [resolvable:$true] %s17
      %20 = dma.hbm_to_vmem [thread:$0]  %s0, 128, %s18, [#allocation3]
    $region5: #{tpu_custom_call.1} parent=1 // pred_fallthru
      _
    // Predicated region
    $region6: #{tpu_custom_call.1} parent=1 // pred_check
      _
    $region7: #{tpu_custom_call.1} parent=1 // pred_check_branch
      %22 = sbr.rel (0) target = $region9
    $region8: #{tpu_custom_call.1} parent=1 // pred_region
      %s24 = ssub.s32 2048, 2048
      %25 = vsyncadd [#allocation6], %s24
      %s26 = sshll.u32 [#allocation5], 4
      %s27 = int_to_ptr.vmem [resolvable:$true] %s26
      %32 = dma.hbm_to_vmem [thread:$0]  %s1, 2048, %s27, [#allocation6], 128, 128, 8
    $region9: #{tpu_custom_call.1} parent=1 // pred_fallthru
      _
    // Predicated region
    $region10: #{tpu_custom_call.1} parent=1 // pred_check
      _
    $region11: #{tpu_custom_call.1} parent=1 // pred_check_branch
      %34 = sbr.rel (0) target = $region13
    $region12: #{tpu_custom_call.1} parent=1 // pred_region
      _
    $region13: #{tpu_custom_call.1} parent=1 // pred_fallthru
      _
    // Predicated region
    $region14: #{tpu_custom_call.1} parent=1 // pred_check
      _
    $region15: #{tpu_custom_call.1} parent=1 // pred_check_branch
      %36 = sbr.rel (0) target = $region17
    $region16: #{tpu_custom_call.1} parent=1 // pred_region
      %37 = dma.done [#allocation3], 128
    $region17: #{tpu_custom_call.1} parent=1 // pred_fallthru
      _
    // Predicated region
    $region18: #{tpu_custom_call.1} parent=1 // pred_check
      _
    $region19: #{tpu_custom_call.1} parent=1 // pred_check_branch
      %39 = sbr.rel (0) target = $region21
    $region20: #{tpu_custom_call.1} parent=1 // pred_region
      %40 = dma.done [#allocation6], 2048
    $region21: #{tpu_custom_call.1} parent=1 // pred_fallthru
      _
    %v41 = vld [vmem:[#allocation2] sm:$0xff]
    %v42 = vld [vmem:[#allocation5] sm:$0xff]
    %v43 = vld [vmem:[#allocation5 + $0x8] sm:$0xff]
    %v44 = vld [vmem:[#allocation5 + $0x10] sm:$0xff]
    %v45 = vld [vmem:[#allocation5 + $0x18] sm:$0xff]
    %v46 = vld [vmem:[#allocation5 + $0x20] sm:$0xff]
    %v47 = vld [vmem:[#allocation5 + $0x28] sm:$0xff]
    %v48 = vld [vmem:[#allocation5 + $0x30] sm:$0xff]
    %v49 = vld [vmem:[#allocation5 + $0x38] sm:$0xff]
    %v50 = vld [vmem:[#allocation5 + $0x40] sm:$0xff]
    %v51 = vld [vmem:[#allocation5 + $0x48] sm:$0xff]
    %v52 = vld [vmem:[#allocation5 + $0x50] sm:$0xff]
    %v53 = vld [vmem:[#allocation5 + $0x58] sm:$0xff]
    %v54 = vld [vmem:[#allocation5 + $0x60] sm:$0xff]
    %v55 = vld [vmem:[#allocation5 + $0x68] sm:$0xff]
    %v56 = vld [vmem:[#allocation5 + $0x70] sm:$0xff]
    %v57 = vld [vmem:[#allocation5 + $0x78] sm:$0xff]
    %v58 = vld [vmem:[%s2] sm:$0x1]
    %v60 = vlaneseq
    %v61 = vshrl.u32 %v60, 7
    %v62 = vsub.s32 0, %v61
    %v63 = vrot.slane %v58, %v62
    %65 = vmatprep.subr.mxu0 0.0
    %66 = vmatpush1.xpose.msra.mxu0 %v42
    %67 = vmatprep.subr.mxu0 0.0
    %68 = vmatpush1.xpose.msra.mxu0 %v43
    %69 = vmatprep.subr.mxu0 0.0
    %70 = vmatpush1.xpose.msra.mxu0 %v44
    %71 = vmatprep.subr.mxu0 0.0
    %72 = vmatpush1.xpose.msra.mxu0 %v45
    %73 = vmatprep.subr.mxu0 0.0
    %74 = vmatpush1.xpose.msra.mxu0 %v46
    %75 = vmatprep.subr.mxu0 0.0
    %76 = vmatpush1.xpose.msra.mxu0 %v47
    %77 = vmatprep.subr.mxu0 0.0
    %78 = vmatpush1.xpose.msra.mxu0 %v48
    %79 = vmatprep.subr.mxu0 0.0
    %80 = vmatpush1.xpose.msra.mxu0 %v49
    %81 = vmatprep.subr.mxu0 0.0
    %82 = vmatpush1.xpose.msra.mxu0 %v50
    %83 = vmatprep.subr.mxu0 0.0
    %84 = vmatpush1.xpose.msra.mxu0 %v51
    %85 = vmatprep.subr.mxu0 0.0
    %86 = vmatpush1.xpose.msra.mxu0 %v52
    %87 = vmatprep.subr.mxu0 0.0
    %88 = vmatpush1.xpose.msra.mxu0 %v53
    %89 = vmatprep.subr.mxu0 0.0
    %90 = vmatpush1.xpose.msra.mxu0 %v54
    %91 = vmatprep.subr.mxu0 0.0
    %92 = vmatpush1.xpose.msra.mxu0 %v55
    %93 = vmatprep.subr.mxu0 0.0
    %94 = vmatpush1.xpose.msra.mxu0 %v56
    %95 = vmatprep.subr.mxu0 0.0
    %96 = vmatpush1.xpose.msra.mxu0 %v57
    %97 = vmatprep.subr.mxu0 0.0
    %98 = vmatpush1.xpose.msra.mxu0 0.0
    %99 = vmatprep.subr.mxu0 0.0
    %100 = vmatpush1.xpose.msra.mxu0 0.0
    %101 = vmatprep.subr.mxu0 0.0
    %102 = vmatpush1.xpose.msra.mxu0 0.0
    %103 = vmatprep.subr.mxu0 0.0
    %104 = vmatpush1.xpose.msra.mxu0 0.0
    %105 = vmatprep.subr.mxu0 0.0
    %106 = vmatpush1.xpose.msra.mxu0 0.0
    %107 = vmatprep.subr.mxu0 0.0
    %108 = vmatpush1.xpose.msra.mxu0 0.0
    %109 = vmatprep.subr.mxu0 0.0
    %110 = vmatpush1.xpose.msra.mxu0 0.0
    %111 = vmatprep.subr.mxu0 0.0
    %112 = vmatpush1.xpose.msra.mxu0 0.0
    %113 = vmatprep.subr.mxu0 0.0
    %114 = vmatpush1.xpose.msra.mxu0 0.0
    %115 = vmatprep.subr.mxu0 0.0
    %116 = vmatpush1.xpose.msra.mxu0 0.0
    %117 = vmatprep.subr.mxu0 0.0
    %118 = vmatpush1.xpose.msra.mxu0 0.0
    %119 = vmatprep.subr.mxu0 0.0
    %120 = vmatpush1.xpose.msra.mxu0 0.0
    %121 = vmatprep.subr.mxu0 0.0
    %122 = vmatpush1.xpose.msra.mxu0 0.0
    %123 = vmatprep.subr.mxu0 0.0
    %124 = vmatpush1.xpose.msra.mxu0 0.0
    %125 = vmatprep.subr.mxu0 0.0
    %126 = vmatpush1.xpose.msra.mxu0 0.0
    %127 = vmatprep.subr.mxu0 0.0
    %128 = vmatpush1.xpose.msra.mxu0 0.0
    %129 = vmatprep.mubr.f32.mxu0 0.0
    %130 = vmatmul.mubr.f32.gmra.mrb[0].mxu0 %v41
    %v131 = vpop.f32.mrb[0].mxu0
    %v132 = vadd.f32 %v63, %v131
    %v133 = vpop.f32.mrb[0].mxu0
    %134 = vdwg.mxu0
    %135 = vst [vmem:[#allocation7] sm:$0xff] %v132
    // Predicated region
    $region22: #{tpu_custom_call.1} parent=1 // pred_check
      _
    $region23: #{tpu_custom_call.1} parent=1 // pred_check_branch
      %137 = sbr.rel (0) target = $region25
    $region24: #{tpu_custom_call.1} parent=1 // pred_region
      %s139 = ssub.s32 128, 128
      %140 = vsyncadd [#allocation4], %s139
      %s142 = sshll.u32 [#allocation7], 4
      %s143 = int_to_ptr.vmem [resolvable:$true] %s142
      %145 = dma.vmem_to_hbm [thread:$0]  %s143, 128, %s3, [#allocation4]
    $region25: #{tpu_custom_call.1} parent=1 // pred_fallthru
      _
    // Predicated region
    $region26: #{tpu_custom_call.1} parent=1 // pred_check
      _
    $region27: #{tpu_custom_call.1} parent=1 // pred_check_branch
      %147 = sbr.rel (0) target = $region29
    $region28: #{tpu_custom_call.1} parent=1 // pred_region
      %148 = dma.done [#allocation4], 128
    $region29: #{tpu_custom_call.1} parent=1 // pred_fallthru
      _
    %149 = vsyncpa [#allocation3], 1
    %150 = vsyncpa [#allocation6], 1
    %151 = vsyncpa [#allocation4], 1

</llo_original>
